<compile_context>
chip_gen: v7x
topology: tpu7x:2x2x1
jax: 0.10.0
libtpu: 0.0.40
codegen_flags: <defaults>
</compile_context>

<pallas_src>
import functools
import math

import jax
import jax.numpy as jnp
from jax import lax
from jax.experimental import pallas as pl
from jax.experimental.pallas import tpu as pltpu


def attention_head_kernel(x_ref, w_qkv_ref, o_ref, *, head_size, scale):
    x = x_ref[...]                                                   # (B, T, D)
    w = w_qkv_ref[...]                                               # (D, 3H)

    # Single fused QKV projection; batch is folded into the MXU M dimension
    # (one (B*T, D) @ (D, 3H) pass), f32 accumulation.
    qkv = lax.dot_general(
        x, w,
        dimension_numbers=(((2,), (0,)), ((), ())),
        preferred_element_type=jnp.float32,
    )                                                                # (B, T, 3H)

    q = qkv[..., :head_size] * scale                                 # exact f32 scaling
    k = qkv[..., head_size:2 * head_size]
    v = qkv[..., 2 * head_size:]

    # scores = q @ k^T per batch, contracting both on the H axis (no explicit
    # transpose of k).
    scores = jnp.einsum(
        "bqh,bkh->bqk", q, k, preferred_element_type=jnp.float32
    )                                                                # (B, T, T)

    # Numerically stable softmax over the last axis (exact divide).
    m = jnp.max(scores, axis=-1, keepdims=True)
    e = jnp.exp(scores - m)
    attn = e / jnp.sum(e, axis=-1, keepdims=True)

    # Feed the MXU in the input dtype (no-op for f32, bf16-native otherwise);
    # accumulate in f32.
    out = jnp.einsum(
        "bqk,bkh->bqh",
        attn.astype(x.dtype), v.astype(x.dtype),
        preferred_element_type=jnp.float32,
    )                                                                # (B, T, H)
    o_ref[...] = out.astype(o_ref.dtype)


def prepare_attention_head_params(wq, wk, wv):
    """One-time parameter prep: fuse the three (D, H) projections into (D, 3H).

    Call once (e.g. at model load) and reuse the result; this keeps the concat
    out of the per-call forward path.
    """
    return jnp.concatenate([wq, wk, wv], axis=1)


def attention_head(x, w_qkv, head_size):
    """x: (B, T, D); w_qkv: (D, 3H) from prepare_attention_head_params. Returns (B, T, H)."""
    B, T, D = x.shape
    H = head_size
    assert w_qkv.shape == (D, 3 * H)

    kernel = functools.partial(
        attention_head_kernel,
        head_size=H,
        scale=1.0 / math.sqrt(float(head_size)),
    )

    # Whole problem fits trivially in VMEM: single invocation, no grid, full
    # arrays resident (no per-step pipeline overhead, one DMA per operand).
    return pl.pallas_call(
        kernel,
        out_shape=jax.ShapeDtypeStruct((B, T, H), x.dtype),
        in_specs=[
            pl.BlockSpec(memory_space=pltpu.MemorySpace.VMEM),   # x
            pl.BlockSpec(memory_space=pltpu.MemorySpace.VMEM),   # fused W_qkv
        ],
        out_specs=pl.BlockSpec(memory_space=pltpu.MemorySpace.VMEM),
    )(x, w_qkv)


def attention_head_ref(x, wq, wk, wv, head_size):
    q = jnp.einsum("btd,dh->bth", x, wq)
    k = jnp.einsum("btd,dh->bth", x, wk)
    v = jnp.einsum("btd,dh->bth", x, wv)
    scores = jnp.einsum("bqh,bkh->bqk", q, k) / jnp.sqrt(jnp.float32(head_size))
    attn = jax.nn.softmax(scores, axis=-1)
    return jnp.einsum("bqk,bkh->bqh", attn, v)


if __name__ == "__main__":
    # Small shapes consistent with the module: batch=2, seq=8, in_size=32, head_size=16
    B, T, D, H = 2, 8, 32, 16

    key = jax.random.PRNGKey(0)
    kx, kq, kk, kv = jax.random.split(key, 4)

    x = jax.random.normal(kx, (B, T, D), dtype=jnp.float32)

    # Deterministic init mimicking nn.Linear(in_size, head_size, bias=False):
    # PyTorch weight is (H, D) with uniform(-1/sqrt(D), 1/sqrt(D)); we store W.T -> (D, H).
    bound = 1.0 / jnp.sqrt(jnp.float32(D))
    wq = jax.random.uniform(kq, (H, D), minval=-bound, maxval=bound, dtype=jnp.float32).T
    wk = jax.random.uniform(kk, (H, D), minval=-bound, maxval=bound, dtype=jnp.float32).T
    wv = jax.random.uniform(kv, (H, D), minval=-bound, maxval=bound, dtype=jnp.float32).T

    # One-time weight fusion (hoisted out of the forward path).
    w_qkv = prepare_attention_head_params(wq, wk, wv)
    w_qkv = jax.block_until_ready(w_qkv)

    out = attention_head(x, w_qkv, head_size=H)
    out = jax.block_until_ready(out)

    ref = attention_head_ref(x, wq, wk, wv, head_size=H)
    assert out.shape == (B, T, H)
    assert jnp.allclose(out, ref, atol=1e-5, rtol=1e-5), "mismatch vs reference"

    print("KERNEL_OK")
</pallas_src>

<mosaic_0001>
module attributes {stable_mosaic.version = 11 : i64} {
  func.func @attention_head_kernel(%arg0: memref<2x8x32xf32, #tpu.memory_space<vmem>>, %arg1: memref<32x48xf32, #tpu.memory_space<vmem>>, %arg2: memref<2x8x16xf32, #tpu.memory_space<vmem>>) attributes {dimension_semantics = [], scalar_prefetch = 0 : i64, scratch_operands = 0 : i64, tpu.core_type = #tpu.core_type<tc>} {
    %c0 = arith.constant 0 : index
    %c0_0 = arith.constant 0 : index
    %c0_1 = arith.constant 0 : index
    %0 = vector.load %arg0[%c0, %c0_0, %c0_1] : memref<2x8x32xf32, #tpu.memory_space<vmem>>, vector<2x8x32xf32>
    %c0_2 = arith.constant 0 : index
    %c0_3 = arith.constant 0 : index
    %1 = vector.load %arg1[%c0_2, %c0_3] : memref<32x48xf32, #tpu.memory_space<vmem>>, vector<32x48xf32>
    %cst = arith.constant dense<0.000000e+00> : vector<2x8x48xf32>
    %2 = tpu.matmul %0, %1, %cst {dimension_numbers = #tpu.dot_dimension_numbers<[2], [0], [0, 1], [1], [0, 0, 0, 1, 1, 1], [], []>} : vector<2x8x32xf32>, vector<32x48xf32>, vector<2x8x48xf32> -> vector<2x8x48xf32>
    %3 = vector.extract_strided_slice %2 {offsets = [0, 0, 0], sizes = [2, 8, 16], strides = [1, 1, 1]} : vector<2x8x48xf32> to vector<2x8x16xf32>
    %cst_4 = arith.constant 2.500000e-01 : f32
    %4 = vector.broadcast %cst_4 : f32 to vector<2x8x16xf32>
    %5 = arith.mulf %3, %4 : vector<2x8x16xf32>
    %6 = vector.extract_strided_slice %2 {offsets = [0, 0, 16], sizes = [2, 8, 16], strides = [1, 1, 1]} : vector<2x8x48xf32> to vector<2x8x16xf32>
    %7 = vector.extract_strided_slice %2 {offsets = [0, 0, 32], sizes = [2, 8, 16], strides = [1, 1, 1]} : vector<2x8x48xf32> to vector<2x8x16xf32>
    "tpu.trace_start"() <{level = 10 : i32, message = "bqh,bkh->bqk"}> : () -> ()
    %cst_5 = arith.constant dense<0.000000e+00> : vector<2x8x8xf32>
    %8 = tpu.matmul %5, %6, %cst_5 {dimension_numbers = #tpu.dot_dimension_numbers<[2], [2], [1], [1], [0, 0, 0, 1, 1, 1], [0], [0]>} : vector<2x8x16xf32>, vector<2x8x16xf32>, vector<2x8x8xf32> -> vector<2x8x8xf32>
    "tpu.trace_stop"() : () -> ()
    %cst_6 = arith.constant dense<0xFF800000> : vector<2x8xf32>
    %9 = vector.multi_reduction <maximumf>, %8, %cst_6 [2] : vector<2x8x8xf32> to vector<2x8xf32>
    %10 = vector.shape_cast %9 : vector<2x8xf32> to vector<2x8x1xf32>
    %11 = vector.broadcast %10 : vector<2x8x1xf32> to vector<2x8x8xf32>
    %12 = arith.subf %8, %11 : vector<2x8x8xf32>
    %13 = math.exp %12 : vector<2x8x8xf32>
    %cst_7 = arith.constant dense<0.000000e+00> : vector<2x8xf32>
    %14 = vector.multi_reduction <add>, %13, %cst_7 [2] : vector<2x8x8xf32> to vector<2x8xf32>
    %15 = vector.shape_cast %14 : vector<2x8xf32> to vector<2x8x1xf32>
    %16 = vector.broadcast %15 : vector<2x8x1xf32> to vector<2x8x8xf32>
    %17 = arith.divf %13, %16 : vector<2x8x8xf32>
    "tpu.trace_start"() <{level = 10 : i32, message = "bqk,bkh->bqh"}> : () -> ()
    %cst_8 = arith.constant dense<0.000000e+00> : vector<2x8x16xf32>
    %18 = tpu.matmul %17, %7, %cst_8 {dimension_numbers = #tpu.dot_dimension_numbers<[2], [1], [1], [2], [0, 0, 0, 1, 1, 2], [0], [0]>} : vector<2x8x8xf32>, vector<2x8x16xf32>, vector<2x8x16xf32> -> vector<2x8x16xf32>
    "tpu.trace_stop"() : () -> ()
    %c0_9 = arith.constant 0 : index
    %c0_10 = arith.constant 0 : index
    %c0_11 = arith.constant 0 : index
    %19 = vector.load %arg2[%c0_9, %c0_10, %c0_11] : memref<2x8x16xf32, #tpu.memory_space<vmem>>, vector<2x8x16xf32>
    tpu.vector_store %arg2[%c0_9, %c0_10, %c0_11], %18 {strides = array<i32>} : memref<2x8x16xf32, #tpu.memory_space<vmem>>, vector<2x8x16xf32>,
    return
  }
}

</mosaic_0001>

<llo_original>
// kernel: tpu_custom_call.1
$region0: #{tpu_custom_call.1}
  #allocation0 [shape = 'u32[]', space=smem, size = 0x4, offset = 0x4, fixed_abs, tag = 'smem constant byte address 0x4 - core index']
  #allocation1 [shape = 'u32[144,128]{1,0:T(1,128)}', space=vmem, size = 0x12000, scoped, tag = 'internal scratch']
  %s0 = inlined_call_operand.hbm [shape: f32[2,8,32], index: 0, kind: input, shape index: {}]
  %s1 = inlined_call_operand.hbm [shape: f32[32,48], index: 1, kind: input, shape index: {}]
  %s2 = inlined_call_operand.hbm [shape: f32[2,8,16], index: 2, kind: output, shape index: {}]
  %s3 = sld [smem:[#allocation0]]
  $region26: #{tpu_custom_call.1} parent=0
    _
  %s5 = ssub.s32 1, %s3
  %s6 = scalar_select 0, %s5, %s3
  $region1: #{tpu_custom_call.1} parent=0
    #allocation2 [shape = 'u8[8192]{0}', space=vmem, size = 0x2000, scoped, tag = 'input window, operand 0, single buffered']
    #allocation3 [shape = 's32[1]{0}', space=sflag, size = 0x4, scoped, tag = 'scoped memory for tpu_custom_call.1']
    #allocation4 [shape = 's32[1]{0}', space=sflag, size = 0x4, scoped, tag = 'scoped memory for tpu_custom_call.1']
    #allocation5 [shape = 'u8[16384]{0}', space=vmem, size = 0x4000, scoped, tag = 'input window, operand 1, single buffered']
    #allocation6 [shape = 's32[1]{0}', space=sflag, size = 0x4, scoped, tag = 'scoped memory for tpu_custom_call.1']
    #allocation7 [shape = 'u8[8192]{0}', space=vmem, size = 0x2000, scoped, tag = 'output window, operand 0, single buffered']
    %7 = vsyncpa [#allocation3], 0
    %8 = vsyncpa [#allocation6], 0
    %9 = vsyncpa [#allocation4], 0
    // Predicated region
    $region2: #{tpu_custom_call.1} parent=1 // pred_check
      _
    $region3: #{tpu_custom_call.1} parent=1 // pred_check_branch
      %11 = sbr.rel (0) target = $region5
    $region4: #{tpu_custom_call.1} parent=1 // pred_region
      %s13 = ssub.s32 256, 256
      %14 = vsyncadd [#allocation3], %s13
      %s15 = sshll.u32 [#allocation2], 4
      %s16 = int_to_ptr.vmem [resolvable:$true] %s15
      %21 = dma.hbm_to_vmem [thread:$0]  %s0, 256, %s16, [#allocation3], 128, 128, 8
    $region5: #{tpu_custom_call.1} parent=1 // pred_fallthru
      _
    // Predicated region
    $region6: #{tpu_custom_call.1} parent=1 // pred_check
      _
    $region7: #{tpu_custom_call.1} parent=1 // pred_check_branch
      %23 = sbr.rel (0) target = $region9
    $region8: #{tpu_custom_call.1} parent=1 // pred_region
      %s25 = ssub.s32 512, 512
      %26 = vsyncadd [#allocation6], %s25
      %s27 = sshll.u32 [#allocation5], 4
      %s28 = int_to_ptr.vmem [resolvable:$true] %s27
      %33 = dma.hbm_to_vmem [thread:$0]  %s1, 512, %s28, [#allocation6], 128, 128, 8
    $region9: #{tpu_custom_call.1} parent=1 // pred_fallthru
      _
    // Predicated region
    $region10: #{tpu_custom_call.1} parent=1 // pred_check
      _
    $region11: #{tpu_custom_call.1} parent=1 // pred_check_branch
      %35 = sbr.rel (0) target = $region13
    $region12: #{tpu_custom_call.1} parent=1 // pred_region
      %36 = dma.done [#allocation3], 256
    $region13: #{tpu_custom_call.1} parent=1 // pred_fallthru
      _
    // Predicated region
    $region14: #{tpu_custom_call.1} parent=1 // pred_check
      _
    $region15: #{tpu_custom_call.1} parent=1 // pred_check_branch
      %38 = sbr.rel (0) target = $region17
    $region16: #{tpu_custom_call.1} parent=1 // pred_region
      %39 = dma.done [#allocation6], 512
    $region17: #{tpu_custom_call.1} parent=1 // pred_fallthru
      _
    %v40 = vld [vmem:[#allocation2] sm:$0xff]
    %v41 = vld [vmem:[#allocation2 + $0x8] sm:$0xff]
    %v42 = vld [vmem:[#allocation5] sm:$0xff]
    %v43 = vld [vmem:[#allocation5 + $0x8] sm:$0xff]
    %v44 = vld [vmem:[#allocation5 + $0x10] sm:$0xff]
    %v45 = vld [vmem:[#allocation5 + $0x18] sm:$0xff]
    %vm46 = vcmask 261120
    %v48 = vsel %vm46, %v40, 0
    %v51 = vsel %vm46, %v41, 0
    %53 = vmatprep.subr.mxu0 0.0
    %54 = vmatpush1.msra.mxu0 %v42
    %55 = vmatprep.subr.mxu0 0.0
    %56 = vmatpush1.msra.mxu0 %v43
    %57 = vmatprep.subr.mxu0 0.0
    %58 = vmatpush1.msra.mxu0 %v44
    %59 = vmatprep.subr.mxu0 0.0
    %60 = vmatpush1.msra.mxu0 %v45
    %61 = vmatprep.subr.mxu0 0.0
    %62 = vmatpush1.msra.mxu0 0.0
    %63 = vmatprep.subr.mxu0 0.0
    %64 = vmatpush1.msra.mxu0 0.0
    %65 = vmatprep.subr.mxu0 0.0
    %66 = vmatpush1.msra.mxu0 0.0
    %67 = vmatprep.subr.mxu0 0.0
    %68 = vmatpush1.msra.mxu0 0.0
    %69 = vmatprep.subr.mxu0 0.0
    %70 = vmatpush1.msra.mxu0 0.0
    %71 = vmatprep.subr.mxu0 0.0
    %72 = vmatpush1.msra.mxu0 0.0
    %73 = vmatprep.subr.mxu0 0.0
    %74 = vmatpush1.msra.mxu0 0.0
    %75 = vmatprep.subr.mxu0 0.0
    %76 = vmatpush1.msra.mxu0 0.0
    %77 = vmatprep.subr.mxu0 0.0
    %78 = vmatpush1.msra.mxu0 0.0
    %79 = vmatprep.subr.mxu0 0.0
    %80 = vmatpush1.msra.mxu0 0.0
    %81 = vmatprep.subr.mxu0 0.0
    %82 = vmatpush1.msra.mxu0 0.0
    %83 = vmatprep.subr.mxu0 0.0
    %84 = vmatpush1.msra.mxu0 0.0
    %85 = vmatprep.subr.mxu0 0.0
    %86 = vmatpush1.msra.mxu0 0.0
    %87 = vmatprep.subr.mxu0 0.0
    %88 = vmatpush1.msra.mxu0 0.0
    %89 = vmatprep.subr.mxu0 0.0
    %90 = vmatpush1.msra.mxu0 0.0
    %91 = vmatprep.subr.mxu0 0.0
    %92 = vmatpush1.msra.mxu0 0.0
    %93 = vmatprep.subr.mxu0 0.0
    %94 = vmatpush1.msra.mxu0 0.0
    %95 = vmatprep.subr.mxu0 0.0
    %96 = vmatpush1.msra.mxu0 0.0
    %97 = vmatprep.subr.mxu0 0.0
    %98 = vmatpush1.msra.mxu0 0.0
    %99 = vmatprep.subr.mxu0 0.0
    %100 = vmatpush1.msra.mxu0 0.0
    %101 = vmatprep.subr.mxu0 0.0
    %102 = vmatpush1.msra.mxu0 0.0
    %103 = vmatprep.subr.mxu0 0.0
    %104 = vmatpush1.msra.mxu0 0.0
    %105 = vmatprep.subr.mxu0 0.0
    %106 = vmatpush1.msra.mxu0 0.0
    %107 = vmatprep.subr.mxu0 0.0
    %108 = vmatpush1.msra.mxu0 0.0
    %109 = vmatprep.subr.mxu0 0.0
    %110 = vmatpush1.msra.mxu0 0.0
    %111 = vmatprep.subr.mxu0 0.0
    %112 = vmatpush1.msra.mxu0 0.0
    %113 = vmatprep.subr.mxu0 0.0
    %114 = vmatpush1.msra.mxu0 0.0
    %115 = vmatprep.subr.mxu0 0.0
    %116 = vmatpush1.msra.mxu0 0.0
    %117 = vmatprep.mubr.f32.mxu0 0.0
    %118 = vmatmul.mubr.f32.gmra.mrb[0].mxu0 %v48
    %v119 = vpop.f32.mrb[0].mxu0
    %v120 = vadd.f32 0.0, %v119
    %v121 = vpop.f32.mrb[0].mxu0
    %122 = vmatprep.mubr.f32.mxu0 0.0
    %123 = vmatmul.mubr.f32.gmra.mrb[0].mxu0 %v51
    %v124 = vpop.f32.mrb[0].mxu0
    %v125 = vadd.f32 0.0, %v124
    %v126 = vpop.f32.mrb[0].mxu0
    %127 = vdwg.mxu0
    %v128 = vmul.f32 %v120, 0.25
    %v129 = vmul.f32 %v125, 0.25
    %131 = vrot.lane.b32.xlu0 %v120, 112
    %v132 = vpop.permute.xlu0 %131
    %vm133 = vcmask 130048
    %v135 = vsel %vm133, %v128, 0
    %v137 = vsel %vm133, %v132, 0
    %139 = vmatprep.subr.mxu0 0.0
    %140 = vmatpush1.xpose.msra.mxu0 %v137
    %141 = vmatprep.subr.mxu0 0.0
    %142 = vmatpush1.xpose.msra.mxu0 0.0
    %143 = vmatprep.subr.mxu0 0.0
    %144 = vmatpush1.xpose.msra.mxu0 0.0
    %145 = vmatprep.subr.mxu0 0.0
    %146 = vmatpush1.xpose.msra.mxu0 0.0
    %147 = vmatprep.subr.mxu0 0.0
    %148 = vmatpush1.xpose.msra.mxu0 0.0
    %149 = vmatprep.subr.mxu0 0.0
    %150 = vmatpush1.xpose.msra.mxu0 0.0
    %151 = vmatprep.subr.mxu0 0.0
    %152 = vmatpush1.xpose.msra.mxu0 0.0
    %153 = vmatprep.subr.mxu0 0.0
    %154 = vmatpush1.xpose.msra.mxu0 0.0
    %155 = vmatprep.subr.mxu0 0.0
    %156 = vmatpush1.xpose.msra.mxu0 0.0
    %157 = vmatprep.subr.mxu0 0.0
    %158 = vmatpush1.xpose.msra.mxu0 0.0
    %159 = vmatprep.subr.mxu0 0.0
    %160 = vmatpush1.xpose.msra.mxu0 0.0
    %161 = vmatprep.subr.mxu0 0.0
    %162 = vmatpush1.xpose.msra.mxu0 0.0
    %163 = vmatprep.subr.mxu0 0.0
    %164 = vmatpush1.xpose.msra.mxu0 0.0
    %165 = vmatprep.subr.mxu0 0.0
    %166 = vmatpush1.xpose.msra.mxu0 0.0
    %167 = vmatprep.subr.mxu0 0.0
    %168 = vmatpush1.xpose.msra.mxu0 0.0
    %169 = vmatprep.subr.mxu0 0.0
    %170 = vmatpush1.xpose.msra.mxu0 0.0
    %171 = vmatprep.subr.mxu0 0.0
    %172 = vmatpush1.xpose.msra.mxu0 0.0
    %173 = vmatprep.subr.mxu0 0.0
    %174 = vmatpush1.xpose.msra.mxu0 0.0
    %175 = vmatprep.subr.mxu0 0.0
    %176 = vmatpush1.xpose.msra.mxu0 0.0
    %177 = vmatprep.subr.mxu0 0.0
    %178 = vmatpush1.xpose.msra.mxu0 0.0
    %179 = vmatprep.subr.mxu0 0.0
    %180 = vmatpush1.xpose.msra.mxu0 0.0
    %181 = vmatprep.subr.mxu0 0.0
    %182 = vmatpush1.xpose.msra.mxu0 0.0
    %183 = vmatprep.subr.mxu0 0.0
    %184 = vmatpush1.xpose.msra.mxu0 0.0
    %185 = vmatprep.subr.mxu0 0.0
    %186 = vmatpush1.xpose.msra.mxu0 0.0
    %187 = vmatprep.subr.mxu0 0.0
    %188 = vmatpush1.xpose.msra.mxu0 0.0
    %189 = vmatprep.subr.mxu0 0.0
    %190 = vmatpush1.xpose.msra.mxu0 0.0
    %191 = vmatprep.subr.mxu0 0.0
    %192 = vmatpush1.xpose.msra.mxu0 0.0
    %193 = vmatprep.subr.mxu0 0.0
    %194 = vmatpush1.xpose.msra.mxu0 0.0
    %195 = vmatprep.subr.mxu0 0.0
    %196 = vmatpush1.xpose.msra.mxu0 0.0
    %197 = vmatprep.subr.mxu0 0.0
    %198 = vmatpush1.xpose.msra.mxu0 0.0
    %199 = vmatprep.subr.mxu0 0.0
    %200 = vmatpush1.xpose.msra.mxu0 0.0
    %201 = vmatprep.subr.mxu0 0.0
    %202 = vmatpush1.xpose.msra.mxu0 0.0
    %203 = vmatprep.mubr.f32.mxu0 0.0
    %204 = vmatmul.mubr.f32.gmra.mrb[0].mxu0 %v135
    %v205 = vpop.f32.mrb[0].mxu0
    %v206 = vadd.f32 0.0, %v205
    %v207 = vpop.f32.mrb[0].mxu0
    %208 = vdwg.mxu0
    %210 = vrot.lane.b32.xlu0 %v125, 112
    %v211 = vpop.permute.xlu0 %210
    %v213 = vsel %vm133, %v129, 0
    %v215 = vsel %vm133, %v211, 0
    %217 = vmatprep.subr.mxu0 0.0
    %218 = vmatpush1.xpose.msra.mxu0 %v215
    %219 = vmatprep.subr.mxu0 0.0
    %220 = vmatpush1.xpose.msra.mxu0 0.0
    %221 = vmatprep.subr.mxu0 0.0
    %222 = vmatpush1.xpose.msra.mxu0 0.0
    %223 = vmatprep.subr.mxu0 0.0
    %224 = vmatpush1.xpose.msra.mxu0 0.0
    %225 = vmatprep.subr.mxu0 0.0
    %226 = vmatpush1.xpose.msra.mxu0 0.0
    %227 = vmatprep.subr.mxu0 0.0
    %228 = vmatpush1.xpose.msra.mxu0 0.0
    %229 = vmatprep.subr.mxu0 0.0
    %230 = vmatpush1.xpose.msra.mxu0 0.0
    %231 = vmatprep.subr.mxu0 0.0
    %232 = vmatpush1.xpose.msra.mxu0 0.0
    %233 = vmatprep.subr.mxu0 0.0
    %234 = vmatpush1.xpose.msra.mxu0 0.0
    %235 = vmatprep.subr.mxu0 0.0
    %236 = vmatpush1.xpose.msra.mxu0 0.0
    %237 = vmatprep.subr.mxu0 0.0
    %238 = vmatpush1.xpose.msra.mxu0 0.0
    %239 = vmatprep.subr.mxu0 0.0
    %240 = vmatpush1.xpose.msra.mxu0 0.0
    %241 = vmatprep.subr.mxu0 0.0
    %242 = vmatpush1.xpose.msra.mxu0 0.0
    %243 = vmatprep.subr.mxu0 0.0
    %244 = vmatpush1.xpose.msra.mxu0 0.0
    %245 = vmatprep.subr.mxu0 0.0
    %246 = vmatpush1.xpose.msra.mxu0 0.0
    %247 = vmatprep.subr.mxu0 0.0
    %248 = vmatpush1.xpose.msra.mxu0 0.0
    %249 = vmatprep.subr.mxu0 0.0
    %250 = vmatpush1.xpose.msra.mxu0 0.0
    %251 = vmatprep.subr.mxu0 0.0
    %252 = vmatpush1.xpose.msra.mxu0 0.0
    %253 = vmatprep.subr.mxu0 0.0
    %254 = vmatpush1.xpose.msra.mxu0 0.0
    %255 = vmatprep.subr.mxu0 0.0
    %256 = vmatpush1.xpose.msra.mxu0 0.0
    %257 = vmatprep.subr.mxu0 0.0
    %258 = vmatpush1.xpose.msra.mxu0 0.0
    %259 = vmatprep.subr.mxu0 0.0
    %260 = vmatpush1.xpose.msra.mxu0 0.0
    %261 = vmatprep.subr.mxu0 0.0
    %262 = vmatpush1.xpose.msra.mxu0 0.0
    %263 = vmatprep.subr.mxu0 0.0
    %264 = vmatpush1.xpose.msra.mxu0 0.0
    %265 = vmatprep.subr.mxu0 0.0
    %266 = vmatpush1.xpose.msra.mxu0 0.0
    %267 = vmatprep.subr.mxu0 0.0
    %268 = vmatpush1.xpose.msra.mxu0 0.0
    %269 = vmatprep.subr.mxu0 0.0
    %270 = vmatpush1.xpose.msra.mxu0 0.0
    %271 = vmatprep.subr.mxu0 0.0
    %272 = vmatpush1.xpose.msra.mxu0 0.0
    %273 = vmatprep.subr.mxu0 0.0
    %274 = vmatpush1.xpose.msra.mxu0 0.0
    %275 = vmatprep.subr.mxu0 0.0
    %276 = vmatpush1.xpose.msra.mxu0 0.0
    %277 = vmatprep.subr.mxu0 0.0
    %278 = vmatpush1.xpose.msra.mxu0 0.0
    %279 = vmatprep.subr.mxu0 0.0
    %280 = vmatpush1.xpose.msra.mxu0 0.0
    %281 = vmatprep.mubr.f32.mxu0 0.0
    %282 = vmatmul.mubr.f32.gmra.mrb[0].mxu0 %v213
    %v283 = vpop.f32.mrb[0].mxu0
    %v284 = vadd.f32 0.0, %v283
    %v285 = vpop.f32.mrb[0].mxu0
    %286 = vdwg.mxu0
    %vm287 = vcmask 64512
    %v288 = vsel %vm287, %v206, -inf
    %289 = vmax.xlane.f32.xlu0 %v288
    %v290 = vpop.xlane.xlu0 %289
    %v291 = vsel %vm287, %v284, -inf
    %292 = vmax.xlane.f32.xlu0 %v291
    %v293 = vpop.xlane.xlu0 %292
    %v294 = vsub.f32 %v206, %v290
    %v295 = vsub.f32 %v284, %v293
    %v296 = vmul.f32 %v294, 1.442695
    %v297 = vpow.pop %v296
    %v298 = vmul.f32 %v295, 1.442695
    %v299 = vpow.pop %v298
    %v300 = vsel %vm287, %v297, 0.0
    %301 = vadd.xlane.f32.xlu0 %v300
    %v302 = vpop.xlane.xlu0 %301
    %v303 = vsel %vm287, %v299, 0.0
    %304 = vadd.xlane.f32.xlu0 %v303
    %v305 = vpop.xlane.xlu0 %304
    %v306 = vrcp.pop %v302
    %v307 = vmul.f32 %v297, %v306
    %v308 = vrcp.pop %v305
    %v309 = vmul.f32 %v299, %v308
    %310 = vrot.lane.b32.xlu0 %v120, 96
    %v311 = vpop.permute.xlu0 %310
    %v314 = vsel %vm287, %v307, 0
    %316 = vmatprep.subr.mxu0 0.0
    %317 = vmatpush1.msra.mxu0 %v311
    %318 = vmatprep.subr.mxu0 0.0
    %319 = vmatpush1.msra.mxu0 0.0
    %320 = vmatprep.subr.mxu0 0.0
    %321 = vmatpush1.msra.mxu0 0.0
    %322 = vmatprep.subr.mxu0 0.0
    %323 = vmatpush1.msra.mxu0 0.0
    %324 = vmatprep.subr.mxu0 0.0
    %325 = vmatpush1.msra.mxu0 0.0
    %326 = vmatprep.subr.mxu0 0.0
    %327 = vmatpush1.msra.mxu0 0.0
    %328 = vmatprep.subr.mxu0 0.0
    %329 = vmatpush1.msra.mxu0 0.0
    %330 = vmatprep.subr.mxu0 0.0
    %331 = vmatpush1.msra.mxu0 0.0
    %332 = vmatprep.subr.mxu0 0.0
    %333 = vmatpush1.msra.mxu0 0.0
    %334 = vmatprep.subr.mxu0 0.0
    %335 = vmatpush1.msra.mxu0 0.0
    %336 = vmatprep.subr.mxu0 0.0
    %337 = vmatpush1.msra.mxu0 0.0
    %338 = vmatprep.subr.mxu0 0.0
    %339 = vmatpush1.msra.mxu0 0.0
    %340 = vmatprep.subr.mxu0 0.0
    %341 = vmatpush1.msra.mxu0 0.0
    %342 = vmatprep.subr.mxu0 0.0
    %343 = vmatpush1.msra.mxu0 0.0
    %344 = vmatprep.subr.mxu0 0.0
    %345 = vmatpush1.msra.mxu0 0.0
    %346 = vmatprep.subr.mxu0 0.0
    %347 = vmatpush1.msra.mxu0 0.0
    %348 = vmatprep.subr.mxu0 0.0
    %349 = vmatpush1.msra.mxu0 0.0
    %350 = vmatprep.subr.mxu0 0.0
    %351 = vmatpush1.msra.mxu0 0.0
    %352 = vmatprep.subr.mxu0 0.0
    %353 = vmatpush1.msra.mxu0 0.0
    %354 = vmatprep.subr.mxu0 0.0
    %355 = vmatpush1.msra.mxu0 0.0
    %356 = vmatprep.subr.mxu0 0.0
    %357 = vmatpush1.msra.mxu0 0.0
    %358 = vmatprep.subr.mxu0 0.0
    %359 = vmatpush1.msra.mxu0 0.0
    %360 = vmatprep.subr.mxu0 0.0
    %361 = vmatpush1.msra.mxu0 0.0
    %362 = vmatprep.subr.mxu0 0.0
    %363 = vmatpush1.msra.mxu0 0.0
    %364 = vmatprep.subr.mxu0 0.0
    %365 = vmatpush1.msra.mxu0 0.0
    %366 = vmatprep.subr.mxu0 0.0
    %367 = vmatpush1.msra.mxu0 0.0
    %368 = vmatprep.subr.mxu0 0.0
    %369 = vmatpush1.msra.mxu0 0.0
    %370 = vmatprep.subr.mxu0 0.0
    %371 = vmatpush1.msra.mxu0 0.0
    %372 = vmatprep.subr.mxu0 0.0
    %373 = vmatpush1.msra.mxu0 0.0
    %374 = vmatprep.subr.mxu0 0.0
    %375 = vmatpush1.msra.mxu0 0.0
    %376 = vmatprep.subr.mxu0 0.0
    %377 = vmatpush1.msra.mxu0 0.0
    %378 = vmatprep.subr.mxu0 0.0
    %379 = vmatpush1.msra.mxu0 0.0
    %380 = vmatprep.mubr.f32.mxu0 0.0
    %381 = vmatmul.mubr.f32.gmra.mrb[0].mxu0 %v314
    %v382 = vpop.f32.mrb[0].mxu0
    %v383 = vadd.f32 0.0, %v382
    %v384 = vpop.f32.mrb[0].mxu0
    %385 = vdwg.mxu0
    %386 = vrot.lane.b32.xlu0 %v125, 96
    %v387 = vpop.permute.xlu0 %386
    %v390 = vsel %vm287, %v309, 0
    %392 = vmatprep.subr.mxu0 0.0
    %393 = vmatpush1.msra.mxu0 %v387
    %394 = vmatprep.subr.mxu0 0.0
    %395 = vmatpush1.msra.mxu0 0.0
    %396 = vmatprep.subr.mxu0 0.0
    %397 = vmatpush1.msra.mxu0 0.0
    %398 = vmatprep.subr.mxu0 0.0
    %399 = vmatpush1.msra.mxu0 0.0
    %400 = vmatprep.subr.mxu0 0.0
    %401 = vmatpush1.msra.mxu0 0.0
    %402 = vmatprep.subr.mxu0 0.0
    %403 = vmatpush1.msra.mxu0 0.0
    %404 = vmatprep.subr.mxu0 0.0
    %405 = vmatpush1.msra.mxu0 0.0
    %406 = vmatprep.subr.mxu0 0.0
    %407 = vmatpush1.msra.mxu0 0.0
    %408 = vmatprep.subr.mxu0 0.0
    %409 = vmatpush1.msra.mxu0 0.0
    %410 = vmatprep.subr.mxu0 0.0
    %411 = vmatpush1.msra.mxu0 0.0
    %412 = vmatprep.subr.mxu0 0.0
    %413 = vmatpush1.msra.mxu0 0.0
    %414 = vmatprep.subr.mxu0 0.0
    %415 = vmatpush1.msra.mxu0 0.0
    %416 = vmatprep.subr.mxu0 0.0
    %417 = vmatpush1.msra.mxu0 0.0
    %418 = vmatprep.subr.mxu0 0.0
    %419 = vmatpush1.msra.mxu0 0.0
    %420 = vmatprep.subr.mxu0 0.0
    %421 = vmatpush1.msra.mxu0 0.0
    %422 = vmatprep.subr.mxu0 0.0
    %423 = vmatpush1.msra.mxu0 0.0
    %424 = vmatprep.subr.mxu0 0.0
    %425 = vmatpush1.msra.mxu0 0.0
    %426 = vmatprep.subr.mxu0 0.0
    %427 = vmatpush1.msra.mxu0 0.0
    %428 = vmatprep.subr.mxu0 0.0
    %429 = vmatpush1.msra.mxu0 0.0
    %430 = vmatprep.subr.mxu0 0.0
    %431 = vmatpush1.msra.mxu0 0.0
    %432 = vmatprep.subr.mxu0 0.0
    %433 = vmatpush1.msra.mxu0 0.0
    %434 = vmatprep.subr.mxu0 0.0
    %435 = vmatpush1.msra.mxu0 0.0
    %436 = vmatprep.subr.mxu0 0.0
    %437 = vmatpush1.msra.mxu0 0.0
    %438 = vmatprep.subr.mxu0 0.0
    %439 = vmatpush1.msra.mxu0 0.0
    %440 = vmatprep.subr.mxu0 0.0
    %441 = vmatpush1.msra.mxu0 0.0
    %442 = vmatprep.subr.mxu0 0.0
    %443 = vmatpush1.msra.mxu0 0.0
    %444 = vmatprep.subr.mxu0 0.0
    %445 = vmatpush1.msra.mxu0 0.0
    %446 = vmatprep.subr.mxu0 0.0
    %447 = vmatpush1.msra.mxu0 0.0
    %448 = vmatprep.subr.mxu0 0.0
    %449 = vmatpush1.msra.mxu0 0.0
    %450 = vmatprep.subr.mxu0 0.0
    %451 = vmatpush1.msra.mxu0 0.0
    %452 = vmatprep.subr.mxu0 0.0
    %453 = vmatpush1.msra.mxu0 0.0
    %454 = vmatprep.subr.mxu0 0.0
    %455 = vmatpush1.msra.mxu0 0.0
    %456 = vmatprep.mubr.f32.mxu0 0.0
    %457 = vmatmul.mubr.f32.gmra.mrb[0].mxu0 %v390
    %v458 = vpop.f32.mrb[0].mxu0
    %v459 = vadd.f32 0.0, %v458
    %v460 = vpop.f32.mrb[0].mxu0
    %461 = vdwg.mxu0
    %462 = vst.msk [vmem:[#allocation7] sm:$0xff] %vm133, %v383
    %463 = vst.msk [vmem:[#allocation7 + $0x8] sm:$0xff] %vm133, %v459
    // Predicated region
    $region18: #{tpu_custom_call.1} parent=1 // pred_check
      _
    $region19: #{tpu_custom_call.1} parent=1 // pred_check_branch
      %465 = sbr.rel (0) target = $region21
    $region20: #{tpu_custom_call.1} parent=1 // pred_region
      %s467 = ssub.s32 256, 256
      %468 = vsyncadd [#allocation4], %s467
      %s469 = sshll.u32 [#allocation7], 4
      %s470 = int_to_ptr.vmem [resolvable:$true] %s469
      %475 = dma.vmem_to_hbm [thread:$0]  %s470, 256, %s2, [#allocation4], 128, 128, 8
    $region21: #{tpu_custom_call.1} parent=1 // pred_fallthru
      _
    // Predicated region
    $region22: #{tpu_custom_call.1} parent=1 // pred_check
      _
    $region23: #{tpu_custom_call.1} parent=1 // pred_check_branch
      %477 = sbr.rel (0) target = $region25
    $region24: #{tpu_custom_call.1} parent=1 // pred_region
      %478 = dma.done [#allocation4], 256
    $region25: #{tpu_custom_call.1} parent=1 // pred_fallthru
      _
    %479 = vsyncpa [#allocation3], 1
    %480 = vsyncpa [#allocation6], 1
    %481 = vsyncpa [#allocation4], 1

</llo_original>
